<compile_context>
chip_gen: v6e
topology: v6e:2x2x1
jax: 0.10.0
libtpu: 0.0.40
codegen_flags: <defaults>
</compile_context>

<pallas_src>
import jax
import jax.numpy as jnp
import numpy as np
from jax.experimental import pallas as pl
from jax.experimental.pallas import tpu as pltpu

_EPS = 1e-5  # PyTorch BatchNorm1d default
_LANE = 128


def _round_up(x, m):
    return ((x + m - 1) // m) * m


def _pad_to(a, size, axis):
    pad = size - a.shape[axis]
    if pad == 0:
        return a
    widths = [(0, 0)] * a.ndim
    widths[axis] = (0, pad)
    return jnp.pad(a, widths)


# ---------------------------------------------------------------------------
# kernels
# ---------------------------------------------------------------------------
def _fused_conv(h, w_ref):
    """Conv1d(k=3, padding=1, bias=False) on a channels-last (L, Cin) tile
    as a single MXU matmul against a (3*Cin, Cout) fused-tap weight."""
    zrow = jnp.zeros((1, h.shape[1]), h.dtype)
    h_prev = jnp.concatenate([zrow, h[:-1, :]], axis=0)   # neighbor l-1 (zero pad)
    h_next = jnp.concatenate([h[1:, :], zrow], axis=0)    # neighbor l+1 (zero pad)
    hcat = jnp.concatenate([h_prev, h, h_next], axis=-1)  # (L, 3*Cin)
    return jnp.dot(hcat, w_ref[...], preferred_element_type=jnp.float32)


def _write_partial_stats(st_ref, y):
    s = jnp.sum(y, axis=0, keepdims=True)        # (1, C)
    sq = jnp.sum(y * y, axis=0, keepdims=True)   # (1, C)
    st_ref[0] = jnp.concatenate([s, sq], axis=0)  # (2, C)


def pool_conv1_kernel(xe_ref, xo_ref, w1_ref, y1_ref, st1_ref):
    # MaxPool1d(kernel=2, stride=2): elementwise max of the even/odd streams.
    h = jnp.maximum(xe_ref[0], xo_ref[0]).astype(jnp.float32)   # (Lp, Cin)
    y = _fused_conv(h, w1_ref)                                   # (Lp, Cmid_p)
    y1_ref[0] = y.astype(y1_ref.dtype)
    _write_partial_stats(st1_ref, y)


def bn1_conv2_kernel(y1_ref, s1_ref, t1_ref, w2_ref, y2_ref, st2_ref):
    # folded BatchNorm1 (scale/shift) + ReLU, then second conv.
    h = jnp.maximum(y1_ref[0] * s1_ref[...] + t1_ref[...], 0.0)  # (Lp, Cmid_p)
    y = _fused_conv(h, w2_ref)                                   # (Lp, Cout_p)
    y2_ref[0] = y.astype(y2_ref.dtype)
    _write_partial_stats(st2_ref, y)


def bn2_relu_kernel(y2_ref, s2_ref, t2_ref, out_ref):
    out_ref[0] = jnp.maximum(
        y2_ref[0] * s2_ref[...] + t2_ref[...], 0.0).astype(out_ref.dtype)


# ---------------------------------------------------------------------------
# wrapper
# ---------------------------------------------------------------------------
def _bn_fold(stats, gamma_p, beta_p, count):
    """Reduce per-block (sum, sumsq) partials into per-channel scale/shift."""
    ssum = jnp.sum(stats[:, 0, :], axis=0)
    ssq = jnp.sum(stats[:, 1, :], axis=0)
    mu = ssum / count
    var = jnp.maximum(ssq / count - mu * mu, 0.0)   # biased variance (training BN)
    s = gamma_p * jax.lax.rsqrt(var + _EPS)
    t = beta_p - mu * s
    return s.reshape(1, -1), t.reshape(1, -1)


def down_forward(x, w1, g1, b1, w2, g2, b2):
    """x: (N, Cin, L) like PyTorch NCL. Returns (N, Cout, L // 2)."""
    N, Cin, L = x.shape
    Lp = L // 2
    Cmid = w1.shape[0]            # PyTorch Conv1d weight: (out, in, k)
    Cout = w2.shape[0]
    Cmid_p = _round_up(Cmid, _LANE)
    Cout_p = _round_up(Cout, _LANE)
    count = jnp.float32(N * Lp)
    par = pltpu.CompilerParams(dimension_semantics=("parallel",))

    # ---- layout plumbing (host side) ----
    x_nlc = jnp.transpose(x, (0, 2, 1))[:, : 2 * Lp, :]   # (N, 2*Lp, Cin), floor pool
    xe = x_nlc[:, 0::2, :]                                 # (N, Lp, Cin)
    xo = x_nlc[:, 1::2, :]

    # fused-tap weights: W[(k, c_in), c_out] = w[c_out, c_in, k]; pad out-channels.
    w1f = jnp.transpose(w1, (2, 1, 0)).reshape(3 * Cin, Cmid)
    w1f = _pad_to(w1f, Cmid_p, axis=1).astype(jnp.float32)          # (3*Cin, Cmid_p)
    w2t = jnp.transpose(w2, (2, 1, 0))                               # (3, Cmid, Cout)
    w2t = _pad_to(_pad_to(w2t, Cmid_p, axis=1), Cout_p, axis=2)
    w2f = w2t.reshape(3 * Cmid_p, Cout_p).astype(jnp.float32)        # (3*Cmid_p, Cout_p)

    g1p = _pad_to(g1.astype(jnp.float32), Cmid_p, axis=0)
    b1p = _pad_to(b1.astype(jnp.float32), Cmid_p, axis=0)
    g2p = _pad_to(g2.astype(jnp.float32), Cout_p, axis=0)
    b2p = _pad_to(b2.astype(jnp.float32), Cout_p, axis=0)

    # ---- pass 1: pool + conv1 + partial BN1 stats ----
    y1, st1 = pl.pallas_call(
        pool_conv1_kernel,
        out_shape=(jax.ShapeDtypeStruct((N, Lp, Cmid_p), jnp.float32),
                   jax.ShapeDtypeStruct((N, 2, Cmid_p), jnp.float32)),
        grid=(N,),
        in_specs=[
            pl.BlockSpec((1, Lp, Cin), lambda n: (n, 0, 0)),
            pl.BlockSpec((1, Lp, Cin), lambda n: (n, 0, 0)),
            pl.BlockSpec((3 * Cin, Cmid_p), lambda n: (0, 0)),   # resident weight
        ],
        out_specs=(pl.BlockSpec((1, Lp, Cmid_p), lambda n: (n, 0, 0)),
                   pl.BlockSpec((1, 2, Cmid_p), lambda n: (n, 0, 0))),
        compiler_params=par,
    )(xe, xo, w1f)

    s1, t1 = _bn_fold(st1, g1p, b1p, count)

    # ---- pass 2: BN1+ReLU (folded) + conv2 + partial BN2 stats ----
    y2, st2 = pl.pallas_call(
        bn1_conv2_kernel,
        out_shape=(jax.ShapeDtypeStruct((N, Lp, Cout_p), jnp.float32),
                   jax.ShapeDtypeStruct((N, 2, Cout_p), jnp.float32)),
        grid=(N,),
        in_specs=[
            pl.BlockSpec((1, Lp, Cmid_p), lambda n: (n, 0, 0)),
            pl.BlockSpec((1, Cmid_p), lambda n: (0, 0)),
            pl.BlockSpec((1, Cmid_p), lambda n: (0, 0)),
            pl.BlockSpec((3 * Cmid_p, Cout_p), lambda n: (0, 0)),
        ],
        out_specs=(pl.BlockSpec((1, Lp, Cout_p), lambda n: (n, 0, 0)),
                   pl.BlockSpec((1, 2, Cout_p), lambda n: (n, 0, 0))),
        compiler_params=par,
    )(y1, s1, t1, w2f)

    s2, t2 = _bn_fold(st2, g2p, b2p, count)

    # ---- pass 3: BN2+ReLU (folded) ----
    out = pl.pallas_call(
        bn2_relu_kernel,
        out_shape=jax.ShapeDtypeStruct((N, Lp, Cout_p), x.dtype),
        grid=(N,),
        in_specs=[
            pl.BlockSpec((1, Lp, Cout_p), lambda n: (n, 0, 0)),
            pl.BlockSpec((1, Cout_p), lambda n: (0, 0)),
            pl.BlockSpec((1, Cout_p), lambda n: (0, 0)),
        ],
        out_specs=pl.BlockSpec((1, Lp, Cout_p), lambda n: (n, 0, 0)),
        compiler_params=par,
    )(y2, s2, t2)

    out = out[:, :, :Cout]                      # drop lane padding
    return jnp.transpose(out, (0, 2, 1))        # back to NCL


# ---------------------------------------------------------------------------
# pure-JAX reference (training-mode BN), mirrors the PyTorch forward
# ---------------------------------------------------------------------------
def ref_forward(x, w1, g1, b1, w2, g2, b2):
    N, Cin, L = x.shape
    xp = x[:, :, : 2 * (L // 2)].reshape(N, Cin, L // 2, 2).max(-1)   # MaxPool1d(2)

    def conv_bn_relu(h, w, g, b):
        y = jax.lax.conv_general_dilated(
            h, w, window_strides=(1,), padding=((1, 1),),
            dimension_numbers=("NCH", "OIH", "NCH"))
        mu = y.mean(axis=(0, 2), keepdims=True)
        var = ((y - mu) ** 2).mean(axis=(0, 2), keepdims=True)
        yhat = (y - mu) / jnp.sqrt(var + _EPS)
        return jnp.maximum(yhat * g[None, :, None] + b[None, :, None], 0.0)

    h1 = conv_bn_relu(xp, w1, g1, b1)
    return conv_bn_relu(h1, w2, g2, b2)


if __name__ == "__main__":
    key = jax.random.PRNGKey(0)
    N, Cin, L = 2, 4, 16
    Cout = 8  # Down(in_channels=4, out_channels=8); mid_channels = out_channels

    ks = jax.random.split(key, 7)
    x = jax.random.normal(ks[0], (N, Cin, L), jnp.float32)
    w1 = 0.3 * jax.random.normal(ks[1], (Cout, Cin, 3), jnp.float32)
    w2 = 0.3 * jax.random.normal(ks[2], (Cout, Cout, 3), jnp.float32)
    g1 = 1.0 + 0.1 * jax.random.normal(ks[3], (Cout,), jnp.float32)
    b1 = 0.1 * jax.random.normal(ks[4], (Cout,), jnp.float32)
    g2 = 1.0 + 0.1 * jax.random.normal(ks[5], (Cout,), jnp.float32)
    b2 = 0.1 * jax.random.normal(ks[6], (Cout,), jnp.float32)

    fwd = jax.jit(down_forward)
    out = jax.block_until_ready(fwd(x, w1, g1, b1, w2, g2, b2))
    assert out.shape == (N, Cout, L // 2)

    ref = jax.block_until_ready(ref_forward(x, w1, g1, b1, w2, g2, b2))
    np.testing.assert_allclose(np.asarray(out), np.asarray(ref), rtol=1e-3, atol=1e-3)

    print("KERNEL_OK")
</pallas_src>

<mosaic_0001>
module attributes {stable_mosaic.version = 11 : i64} {
  func.func @pool_conv1_kernel(%arg0: i32, %arg1: memref<1x8x4xf32, #tpu.memory_space<vmem>>, %arg2: memref<1x8x4xf32, #tpu.memory_space<vmem>>, %arg3: memref<12x128xf32, #tpu.memory_space<vmem>>, %arg4: memref<1x8x128xf32, #tpu.memory_space<vmem>>, %arg5: memref<1x2x128xf32, #tpu.memory_space<vmem>>) attributes {dimension_semantics = [#tpu.dimension_semantics<parallel>], iteration_bounds = array<i64: 2>, scalar_prefetch = 0 : i64, scratch_operands = 0 : i64, tpu.core_type = #tpu.core_type<tc>, window_params = [{transform_indices = @transform_0, window_bounds = array<i64: 1, 8, 4>}, {transform_indices = @transform_1, window_bounds = array<i64: 1, 8, 4>}, {pipeline_mode = #tpu.pipeline_mode<synchronous>, transform_indices = @transform_2, window_bounds = array<i64: 12, 128>}, {transform_indices = @transform_3, window_bounds = array<i64: 1, 8, 128>}, {transform_indices = @transform_4, window_bounds = array<i64: 1, 2, 128>}]} {
    %c0 = arith.constant 0 : index
    %c0_0 = arith.constant 0 : index
    %c0_1 = arith.constant 0 : index
    %0 = vector.load %arg1[%c0, %c0_0, %c0_1] : memref<1x8x4xf32, #tpu.memory_space<vmem>>, vector<1x8x4xf32>
    %1 = vector.shape_cast %0 : vector<1x8x4xf32> to vector<8x4xf32>
    %c0_2 = arith.constant 0 : index
    %c0_3 = arith.constant 0 : index
    %c0_4 = arith.constant 0 : index
    %2 = vector.load %arg2[%c0_2, %c0_3, %c0_4] : memref<1x8x4xf32, #tpu.memory_space<vmem>>, vector<1x8x4xf32>
    %3 = vector.shape_cast %2 : vector<1x8x4xf32> to vector<8x4xf32>
    %4 = arith.maximumf %1, %3 : vector<8x4xf32>
    %cst = arith.constant 0.000000e+00 : f32
    %5 = vector.broadcast %cst : f32 to vector<1x4xf32>
    %6 = vector.extract_strided_slice %4 {offsets = [0, 0], sizes = [7, 4], strides = [1, 1]} : vector<8x4xf32> to vector<7x4xf32>
    %7 = tpu.concatenate %5, %6 in 0 : vector<1x4xf32>, vector<7x4xf32> -> vector<8x4xf32>
    %8 = vector.extract_strided_slice %4 {offsets = [1, 0], sizes = [7, 4], strides = [1, 1]} : vector<8x4xf32> to vector<7x4xf32>
    %9 = tpu.concatenate %8, %5 in 0 : vector<7x4xf32>, vector<1x4xf32> -> vector<8x4xf32>
    %10 = tpu.concatenate %7, %4, %9 in 1 : vector<8x4xf32>, vector<8x4xf32>, vector<8x4xf32> -> vector<8x12xf32>
    %c0_5 = arith.constant 0 : index
    %c0_6 = arith.constant 0 : index
    %11 = vector.load %arg3[%c0_5, %c0_6] : memref<12x128xf32, #tpu.memory_space<vmem>>, vector<12x128xf32>
    %cst_7 = arith.constant dense<0.000000e+00> : vector<8x128xf32>
    %12 = tpu.matmul %10, %11, %cst_7 {dimension_numbers = #tpu.dot_dimension_numbers<[1], [0], [0], [1], [0, 0, 1, 1], [], []>} : vector<8x12xf32>, vector<12x128xf32>, vector<8x128xf32> -> vector<8x128xf32>
    %c0_8 = arith.constant 0 : index
    %c0_9 = arith.constant 0 : index
    %c0_10 = arith.constant 0 : index
    %13 = vector.load %arg4[%c0_8, %c0_9, %c0_10] : memref<1x8x128xf32, #tpu.memory_space<vmem>>, vector<1x8x128xf32>
    %14 = vector.shape_cast %13 : vector<1x8x128xf32> to vector<8x128xf32>
    %15 = vector.shape_cast %12 : vector<8x128xf32> to vector<1x8x128xf32>
    tpu.vector_store %arg4[%c0_8, %c0_9, %c0_10], %15 {strides = array<i32>} : memref<1x8x128xf32, #tpu.memory_space<vmem>>, vector<1x8x128xf32>,
    %cst_11 = arith.constant dense<0.000000e+00> : vector<128xf32>
    %16 = vector.multi_reduction <add>, %12, %cst_11 [0] : vector<8x128xf32> to vector<128xf32>
    %17 = vector.shape_cast %16 : vector<128xf32> to vector<1x128xf32>
    %18 = arith.mulf %12, %12 : vector<8x128xf32>
    %cst_12 = arith.constant dense<0.000000e+00> : vector<128xf32>
    %19 = vector.multi_reduction <add>, %18, %cst_12 [0] : vector<8x128xf32> to vector<128xf32>
    %20 = vector.shape_cast %19 : vector<128xf32> to vector<1x128xf32>
    %21 = tpu.concatenate %17, %20 in 0 : vector<1x128xf32>, vector<1x128xf32> -> vector<2x128xf32>
    %c0_13 = arith.constant 0 : index
    %c0_14 = arith.constant 0 : index
    %c0_15 = arith.constant 0 : index
    %22 = vector.load %arg5[%c0_13, %c0_14, %c0_15] : memref<1x2x128xf32, #tpu.memory_space<vmem>>, vector<1x2x128xf32>
    %23 = vector.shape_cast %22 : vector<1x2x128xf32> to vector<2x128xf32>
    %24 = vector.shape_cast %21 : vector<2x128xf32> to vector<1x2x128xf32>
    tpu.vector_store %arg5[%c0_13, %c0_14, %c0_15], %24 {strides = array<i32>} : memref<1x2x128xf32, #tpu.memory_space<vmem>>, vector<1x2x128xf32>,
    return
  }
  func.func @transform_0(%arg0: i32) -> (i32, i32, i32) {
    %c0_i32 = arith.constant 0 : i32
    %c0_i32_0 = arith.constant 0 : i32
    %c0_i32_1 = arith.constant 0 : i32
    return %arg0, %c0_i32, %c0_i32_0 : i32, i32, i32
  }
  func.func @transform_1(%arg0: i32) -> (i32, i32, i32) {
    %c0_i32 = arith.constant 0 : i32
    %c0_i32_0 = arith.constant 0 : i32
    %c0_i32_1 = arith.constant 0 : i32
    return %arg0, %c0_i32, %c0_i32_0 : i32, i32, i32
  }
  func.func @transform_2(%arg0: i32) -> (i32, i32) {
    %c0_i32 = arith.constant 0 : i32
    %c0_i32_0 = arith.constant 0 : i32
    %c0_i32_1 = arith.constant 0 : i32
    return %c0_i32, %c0_i32_0 : i32, i32
  }
  func.func @transform_3(%arg0: i32) -> (i32, i32, i32) {
    %c0_i32 = arith.constant 0 : i32
    %c0_i32_0 = arith.constant 0 : i32
    %c0_i32_1 = arith.constant 0 : i32
    return %arg0, %c0_i32, %c0_i32_0 : i32, i32, i32
  }
  func.func @transform_4(%arg0: i32) -> (i32, i32, i32) {
    %c0_i32 = arith.constant 0 : i32
    %c0_i32_0 = arith.constant 0 : i32
    %c0_i32_1 = arith.constant 0 : i32
    return %arg0, %c0_i32, %c0_i32_0 : i32, i32, i32
  }
}

module attributes {stable_mosaic.version = 11 : i64} {
  func.func @bn2_relu_kernel(%arg0: i32, %arg1: memref<1x8x128xf32, #tpu.memory_space<vmem>>, %arg2: memref<1x128xf32, #tpu.memory_space<vmem>>, %arg3: memref<1x128xf32, #tpu.memory_space<vmem>>, %arg4: memref<1x8x128xf32, #tpu.memory_space<vmem>>) attributes {dimension_semantics = [#tpu.dimension_semantics<parallel>], iteration_bounds = array<i64: 2>, scalar_prefetch = 0 : i64, scratch_operands = 0 : i64, tpu.core_type = #tpu.core_type<tc>, window_params = [{transform_indices = @transform_0, window_bounds = array<i64: 1, 8, 128>}, {pipeline_mode = #tpu.pipeline_mode<synchronous>, transform_indices = @transform_1, window_bounds = array<i64: 1, 128>}, {pipeline_mode = #tpu.pipeline_mode<synchronous>, transform_indices = @transform_2, window_bounds = array<i64: 1, 128>}, {transform_indices = @transform_3, window_bounds = array<i64: 1, 8, 128>}]} {
    %c0 = arith.constant 0 : index
    %c0_0 = arith.constant 0 : index
    %c0_1 = arith.constant 0 : index
    %0 = vector.load %arg1[%c0, %c0_0, %c0_1] : memref<1x8x128xf32, #tpu.memory_space<vmem>>, vector<1x8x128xf32>
    %1 = vector.shape_cast %0 : vector<1x8x128xf32> to vector<8x128xf32>
    %c0_2 = arith.constant 0 : index
    %c0_3 = arith.constant 0 : index
    %2 = vector.load %arg2[%c0_2, %c0_3] : memref<1x128xf32, #tpu.memory_space<vmem>>, vector<1x128xf32>
    %3 = vector.broadcast %2 : vector<1x128xf32> to vector<8x128xf32>
    %4 = arith.mulf %1, %3 : vector<8x128xf32>
    %c0_4 = arith.constant 0 : index
    %c0_5 = arith.constant 0 : index
    %5 = vector.load %arg3[%c0_4, %c0_5] : memref<1x128xf32, #tpu.memory_space<vmem>>, vector<1x128xf32>
    %6 = vector.broadcast %5 : vector<1x128xf32> to vector<8x128xf32>
    %7 = arith.addf %4, %6 : vector<8x128xf32>
    %cst = arith.constant 0.000000e+00 : f32
    %8 = vector.broadcast %cst : f32 to vector<8x128xf32>
    %9 = arith.maximumf %7, %8 : vector<8x128xf32>
    %c0_6 = arith.constant 0 : index
    %c0_7 = arith.constant 0 : index
    %c0_8 = arith.constant 0 : index
    %10 = vector.load %arg4[%c0_6, %c0_7, %c0_8] : memref<1x8x128xf32, #tpu.memory_space<vmem>>, vector<1x8x128xf32>
    %11 = vector.shape_cast %10 : vector<1x8x128xf32> to vector<8x128xf32>
    %12 = vector.shape_cast %9 : vector<8x128xf32> to vector<1x8x128xf32>
    tpu.vector_store %arg4[%c0_6, %c0_7, %c0_8], %12 {strides = array<i32>} : memref<1x8x128xf32, #tpu.memory_space<vmem>>, vector<1x8x128xf32>,
    return
  }
  func.func @transform_0(%arg0: i32) -> (i32, i32, i32) {
    %c0_i32 = arith.constant 0 : i32
    %c0_i32_0 = arith.constant 0 : i32
    %c0_i32_1 = arith.constant 0 : i32
    return %arg0, %c0_i32, %c0_i32_0 : i32, i32, i32
  }
  func.func @transform_1(%arg0: i32) -> (i32, i32) {
    %c0_i32 = arith.constant 0 : i32
    %c0_i32_0 = arith.constant 0 : i32
    %c0_i32_1 = arith.constant 0 : i32
    return %c0_i32, %c0_i32_0 : i32, i32
  }
  func.func @transform_2(%arg0: i32) -> (i32, i32) {
    %c0_i32 = arith.constant 0 : i32
    %c0_i32_0 = arith.constant 0 : i32
    %c0_i32_1 = arith.constant 0 : i32
    return %c0_i32, %c0_i32_0 : i32, i32
  }
  func.func @transform_3(%arg0: i32) -> (i32, i32, i32) {
    %c0_i32 = arith.constant 0 : i32
    %c0_i32_0 = arith.constant 0 : i32
    %c0_i32_1 = arith.constant 0 : i32
    return %arg0, %c0_i32, %c0_i32_0 : i32, i32, i32
  }
}

module attributes {stable_mosaic.version = 11 : i64} {
  func.func @bn1_conv2_kernel(%arg0: i32, %arg1: memref<1x8x128xf32, #tpu.memory_space<vmem>>, %arg2: memref<1x128xf32, #tpu.memory_space<vmem>>, %arg3: memref<1x128xf32, #tpu.memory_space<vmem>>, %arg4: memref<384x128xf32, #tpu.memory_space<vmem>>, %arg5: memref<1x8x128xf32, #tpu.memory_space<vmem>>, %arg6: memref<1x2x128xf32, #tpu.memory_space<vmem>>) attributes {dimension_semantics = [#tpu.dimension_semantics<parallel>], iteration_bounds = array<i64: 2>, scalar_prefetch = 0 : i64, scratch_operands = 0 : i64, tpu.core_type = #tpu.core_type<tc>, window_params = [{transform_indices = @transform_0, window_bounds = array<i64: 1, 8, 128>}, {pipeline_mode = #tpu.pipeline_mode<synchronous>, transform_indices = @transform_1, window_bounds = array<i64: 1, 128>}, {pipeline_mode = #tpu.pipeline_mode<synchronous>, transform_indices = @transform_2, window_bounds = array<i64: 1, 128>}, {pipeline_mode = #tpu.pipeline_mode<synchronous>, transform_indices = @transform_3, window_bounds = array<i64: 384, 128>}, {transform_indices = @transform_4, window_bounds = array<i64: 1, 8, 128>}, {transform_indices = @transform_5, window_bounds = array<i64: 1, 2, 128>}]} {
    %c0 = arith.constant 0 : index
    %c0_0 = arith.constant 0 : index
    %c0_1 = arith.constant 0 : index
    %0 = vector.load %arg1[%c0, %c0_0, %c0_1] : memref<1x8x128xf32, #tpu.memory_space<vmem>>, vector<1x8x128xf32>
    %1 = vector.shape_cast %0 : vector<1x8x128xf32> to vector<8x128xf32>
    %c0_2 = arith.constant 0 : index
    %c0_3 = arith.constant 0 : index
    %2 = vector.load %arg2[%c0_2, %c0_3] : memref<1x128xf32, #tpu.memory_space<vmem>>, vector<1x128xf32>
    %3 = vector.broadcast %2 : vector<1x128xf32> to vector<8x128xf32>
    %4 = arith.mulf %1, %3 : vector<8x128xf32>
    %c0_4 = arith.constant 0 : index
    %c0_5 = arith.constant 0 : index
    %5 = vector.load %arg3[%c0_4, %c0_5] : memref<1x128xf32, #tpu.memory_space<vmem>>, vector<1x128xf32>
    %6 = vector.broadcast %5 : vector<1x128xf32> to vector<8x128xf32>
    %7 = arith.addf %4, %6 : vector<8x128xf32>
    %cst = arith.constant 0.000000e+00 : f32
    %8 = vector.broadcast %cst : f32 to vector<8x128xf32>
    %9 = arith.maximumf %7, %8 : vector<8x128xf32>
    %cst_6 = arith.constant 0.000000e+00 : f32
    %10 = vector.broadcast %cst_6 : f32 to vector<1x128xf32>
    %11 = vector.extract_strided_slice %9 {offsets = [0, 0], sizes = [7, 128], strides = [1, 1]} : vector<8x128xf32> to vector<7x128xf32>
    %12 = tpu.concatenate %10, %11 in 0 : vector<1x128xf32>, vector<7x128xf32> -> vector<8x128xf32>
    %13 = vector.extract_strided_slice %9 {offsets = [1, 0], sizes = [7, 128], strides = [1, 1]} : vector<8x128xf32> to vector<7x128xf32>
    %14 = tpu.concatenate %13, %10 in 0 : vector<7x128xf32>, vector<1x128xf32> -> vector<8x128xf32>
    %15 = tpu.concatenate %12, %9, %14 in 1 : vector<8x128xf32>, vector<8x128xf32>, vector<8x128xf32> -> vector<8x384xf32>
    %c0_7 = arith.constant 0 : index
    %c0_8 = arith.constant 0 : index
    %16 = vector.load %arg4[%c0_7, %c0_8] : memref<384x128xf32, #tpu.memory_space<vmem>>, vector<384x128xf32>
    %cst_9 = arith.constant dense<0.000000e+00> : vector<8x128xf32>
    %17 = tpu.matmul %15, %16, %cst_9 {dimension_numbers = #tpu.dot_dimension_numbers<[1], [0], [0], [1], [0, 0, 1, 1], [], []>} : vector<8x384xf32>, vector<384x128xf32>, vector<8x128xf32> -> vector<8x128xf32>
    %c0_10 = arith.constant 0 : index
    %c0_11 = arith.constant 0 : index
    %c0_12 = arith.constant 0 : index
    %18 = vector.load %arg5[%c0_10, %c0_11, %c0_12] : memref<1x8x128xf32, #tpu.memory_space<vmem>>, vector<1x8x128xf32>
    %19 = vector.shape_cast %18 : vector<1x8x128xf32> to vector<8x128xf32>
    %20 = vector.shape_cast %17 : vector<8x128xf32> to vector<1x8x128xf32>
    tpu.vector_store %arg5[%c0_10, %c0_11, %c0_12], %20 {strides = array<i32>} : memref<1x8x128xf32, #tpu.memory_space<vmem>>, vector<1x8x128xf32>,
    %cst_13 = arith.constant dense<0.000000e+00> : vector<128xf32>
    %21 = vector.multi_reduction <add>, %17, %cst_13 [0] : vector<8x128xf32> to vector<128xf32>
    %22 = vector.shape_cast %21 : vector<128xf32> to vector<1x128xf32>
    %23 = arith.mulf %17, %17 : vector<8x128xf32>
    %cst_14 = arith.constant dense<0.000000e+00> : vector<128xf32>
    %24 = vector.multi_reduction <add>, %23, %cst_14 [0] : vector<8x128xf32> to vector<128xf32>
    %25 = vector.shape_cast %24 : vector<128xf32> to vector<1x128xf32>
    %26 = tpu.concatenate %22, %25 in 0 : vector<1x128xf32>, vector<1x128xf32> -> vector<2x128xf32>
    %c0_15 = arith.constant 0 : index
    %c0_16 = arith.constant 0 : index
    %c0_17 = arith.constant 0 : index
    %27 = vector.load %arg6[%c0_15, %c0_16, %c0_17] : memref<1x2x128xf32, #tpu.memory_space<vmem>>, vector<1x2x128xf32>
    %28 = vector.shape_cast %27 : vector<1x2x128xf32> to vector<2x128xf32>
    %29 = vector.shape_cast %26 : vector<2x128xf32> to vector<1x2x128xf32>
    tpu.vector_store %arg6[%c0_15, %c0_16, %c0_17], %29 {strides = array<i32>} : memref<1x2x128xf32, #tpu.memory_space<vmem>>, vector<1x2x128xf32>,
    return
  }
  func.func @transform_0(%arg0: i32) -> (i32, i32, i32) {
    %c0_i32 = arith.constant 0 : i32
    %c0_i32_0 = arith.constant 0 : i32
    %c0_i32_1 = arith.constant 0 : i32
    return %arg0, %c0_i32, %c0_i32_0 : i32, i32, i32
  }
  func.func @transform_1(%arg0: i32) -> (i32, i32) {
    %c0_i32 = arith.constant 0 : i32
    %c0_i32_0 = arith.constant 0 : i32
    %c0_i32_1 = arith.constant 0 : i32
    return %c0_i32, %c0_i32_0 : i32, i32
  }
  func.func @transform_2(%arg0: i32) -> (i32, i32) {
    %c0_i32 = arith.constant 0 : i32
    %c0_i32_0 = arith.constant 0 : i32
    %c0_i32_1 = arith.constant 0 : i32
    return %c0_i32, %c0_i32_0 : i32, i32
  }
  func.func @transform_3(%arg0: i32) -> (i32, i32) {
    %c0_i32 = arith.constant 0 : i32
    %c0_i32_0 = arith.constant 0 : i32
    %c0_i32_1 = arith.constant 0 : i32
    return %c0_i32, %c0_i32_0 : i32, i32
  }
  func.func @transform_4(%arg0: i32) -> (i32, i32, i32) {
    %c0_i32 = arith.constant 0 : i32
    %c0_i32_0 = arith.constant 0 : i32
    %c0_i32_1 = arith.constant 0 : i32
    return %arg0, %c0_i32, %c0_i32_0 : i32, i32, i32
  }
  func.func @transform_5(%arg0: i32) -> (i32, i32, i32) {
    %c0_i32 = arith.constant 0 : i32
    %c0_i32_0 = arith.constant 0 : i32
    %c0_i32_1 = arith.constant 0 : i32
    return %arg0, %c0_i32, %c0_i32_0 : i32, i32, i32
  }
}

</mosaic_0001>

<llo_original>
// kernel: down_forward.5
$region0: #{down_forward.5}
  #allocation0 [shape = 'u32[]', space=smem, size = 0x4, offset = 0x4, fixed_abs, tag = 'smem constant byte address 0x4 - core index']
  #allocation1 [shape = 'u32[144,128]{1,0:T(1,128)}', space=vmem, size = 0x12000, scoped, tag = 'internal scratch']
  %s0 = inlined_call_operand.vmem [shape: f32[2,8,128], index: 0, kind: input, shape index: {}]
  %s1 = inlined_call_operand.vmem [shape: f32[1,128], index: 1, kind: input, shape index: {}]
  %s2 = inlined_call_operand.vmem [shape: f32[1,128], index: 2, kind: input, shape index: {}]
  %s3 = inlined_call_operand.vmem [shape: f32[2,8,128], index: 3, kind: output, shape index: {}]
  %s4 = sld [smem:[#allocation0]]
  $region45: #{down_forward.5} parent=0
    _
  %s6 = ssub.s32 1, %s4
  %s7 = scalar_select 0, %s6, %s4
  loop: start=0, step=1, limit=4
  $region2: #{down_forward.5} parent=0 // loop_pre_header
    _
  $region3: #{down_forward.5} parent=0 // loop_header
    %s9 = sphi 0, %s13
    %p10 = scmp.ge.s32.totalorder %s9, 4
    %s19 = sphi 0, %s21
    %s22 = sphi 0, %s19
    %s23 = sphi 0, %s22
    %s39 = sphi 0, %s23
    %s43 = sphi 0, %s43
    %s45 = sphi 0, %s43
    %s46 = sphi 0, %s45
    %s60 = sphi 0, %s46
    %s64 = sphi 0, %s64
    %s66 = sphi 0, %s64
    %s67 = sphi 0, %s66
    %s81 = sphi 0, %s67
    %s87 = sphi 0, %s89
    %s90 = sphi 0, %s87
    %s91 = sphi 0, %s90
    %s107 = sphi 0, %s91
  $region4: #{down_forward.5} parent=0 // loop_header_branch
    %12 = sbr.rel (%p10) target = $region8
  $region5: #{down_forward.5} parent=0 // loop_body
    %s14 = ssub.s32 %s9, 1
    %s15 = ssub.s32 %s9, 2
    %s16 = sadd.s32 %s9, 1
    %s17 = ssub.s32 %s9, %s16
    %p18 = scmp.eq.s32.totalorder %s17, 0
    %s20 = sadd.s32 %s19, 1
    %s21 = scalar_select %p18, %s19, %s20
    %p24 = pneg %p18
    %p25 = scmp.eq.s32.totalorder %s9, 1
    %p26 = por %p24, %p25
    %p27 = scmp.ne.s32.totalorder %s19, %s22
    %p28 = scmp.eq.s32.totalorder %s9, 0
    %p29 = por %p27, %p28
    %p30 = scmp.ne.s32.totalorder %s19, %s22
    %p31 = scmp.eq.s32.totalorder %s14, 1
    %p32 = por %p30, %p31
    %p33 = scmp.ne.s32.totalorder %s22, %s23
    %p34 = scmp.eq.s32.totalorder %s14, 0
    %p35 = por %p33, %p34
    %p36 = scmp.ne.s32.totalorder %s22, %s23
    %p37 = scmp.eq.s32.totalorder %s15, 1
    %p38 = por %p36, %p37
    %p40 = scmp.ne.s32.totalorder %s23, %s39
    %p41 = scmp.eq.s32.totalorder %s15, 0
    %p42 = por %p40, %p41
    %s44 = sadd.s32 %s43, 1
    %p47 = scmp.eq.s32.totalorder %s9, 1
    %p48 = scmp.ne.s32.totalorder %s43, %s45
    %p49 = scmp.eq.s32.totalorder %s9, 0
    %p50 = por %p48, %p49
    %p51 = scmp.ne.s32.totalorder %s43, %s45
    %p52 = scmp.eq.s32.totalorder %s14, 1
    %p53 = por %p51, %p52
    %p54 = scmp.ne.s32.totalorder %s45, %s46
    %p55 = scmp.eq.s32.totalorder %s14, 0
    %p56 = por %p54, %p55
    %p57 = scmp.ne.s32.totalorder %s45, %s46
    %p58 = scmp.eq.s32.totalorder %s15, 1
    %p59 = por %p57, %p58
    %p61 = scmp.ne.s32.totalorder %s46, %s60
    %p62 = scmp.eq.s32.totalorder %s15, 0
    %p63 = por %p61, %p62
    %s65 = sadd.s32 %s64, 1
    %p68 = scmp.eq.s32.totalorder %s9, 1
    %p69 = scmp.ne.s32.totalorder %s64, %s66
    %p70 = scmp.eq.s32.totalorder %s9, 0
    %p71 = por %p69, %p70
    %p72 = scmp.ne.s32.totalorder %s64, %s66
    %p73 = scmp.eq.s32.totalorder %s14, 1
    %p74 = por %p72, %p73
    %p75 = scmp.ne.s32.totalorder %s66, %s67
    %p76 = scmp.eq.s32.totalorder %s14, 0
    %p77 = por %p75, %p76
    %p78 = scmp.ne.s32.totalorder %s66, %s67
    %p79 = scmp.eq.s32.totalorder %s15, 1
    %p80 = por %p78, %p79
    %p82 = scmp.ne.s32.totalorder %s67, %s81
    %p83 = scmp.eq.s32.totalorder %s15, 0
    %p84 = por %p82, %p83
    %s85 = ssub.s32 %s9, %s16
    %p86 = scmp.eq.s32.totalorder %s85, 0
    %s88 = sadd.s32 %s87, 1
    %s89 = scalar_select %p86, %s87, %s88
    %p92 = pneg %p86
    %p93 = scmp.eq.s32.totalorder %s9, 1
    %p94 = por %p92, %p93
    %p95 = scmp.ne.s32.totalorder %s87, %s90
    %p96 = scmp.eq.s32.totalorder %s9, 0
    %p97 = por %p95, %p96
    %p98 = scmp.ne.s32.totalorder %s87, %s90
    %p99 = scmp.eq.s32.totalorder %s14, 1
    %p100 = por %p98, %p99
    %p101 = scmp.ne.s32.totalorder %s90, %s91
    %p102 = scmp.eq.s32.totalorder %s14, 0
    %p103 = por %p101, %p102
    %p104 = scmp.ne.s32.totalorder %s90, %s91
    %p105 = scmp.eq.s32.totalorder %s15, 1
    %p106 = por %p104, %p105
    %p108 = scmp.ne.s32.totalorder %s91, %s107
    %p109 = scmp.eq.s32.totalorder %s15, 0
    %p110 = por %p108, %p109
    %p111 = scmp.le.s32.totalorder 1, %s9
    %p112 = scmp.lt.s32.totalorder %s9, 3
    %p113 = pnand %p111, %p112
    %p114 = pneg %p113
    // Predicated region
    $region9: #{down_forward.5} parent=5 // pred_check
      _
    $region10: #{down_forward.5} parent=5 // pred_check_branch
      %116 = sbr.rel (%p113) target = $region12
    $region11: #{down_forward.5} parent=5 // pred_region
      %s117 = ssub.s32 %s9, 1
      // Predicated region
      $region13: #{down_forward.5} parent=11 // pred_check
        %p118 = pneg %p56
      $region14: #{down_forward.5} parent=11 // pred_check_branch
        %120 = sbr.rel (%p118) target = $region16
      $region15: #{down_forward.5} parent=11 // pred_region
        _
      $region16: #{down_forward.5} parent=11 // pred_fallthru
        _
      // Predicated region
      $region17: #{down_forward.5} parent=11 // pred_check
        %p121 = pneg %p77
      $region18: #{down_forward.5} parent=11 // pred_check_branch
        %123 = sbr.rel (%p121) target = $region20
      $region19: #{down_forward.5} parent=11 // pred_region
        _
      $region20: #{down_forward.5} parent=11 // pred_fallthru
        _
    $region12: #{down_forward.5} parent=5 // pred_fallthru
      _
    %p124 = scmp.lt.s32.totalorder %s9, 2
    // Predicated region
    $region21: #{down_forward.5} parent=5 // pred_check
      %p125 = pneg %p124
    $region22: #{down_forward.5} parent=5 // pred_check_branch
      %127 = sbr.rel (%p125) target = $region24
    $region23: #{down_forward.5} parent=5 // pred_region
      // Predicated region
      $region25: #{down_forward.5} parent=23 // pred_check
        %p128 = pneg %p29
      $region26: #{down_forward.5} parent=23 // pred_check_branch
        %130 = sbr.rel (%p128) target = $region28
      $region27: #{down_forward.5} parent=23 // pred_region
        %p131 = scmp.lt.s32.totalorder %s9, 1
        %s132 = scalar_select %p131, %s9, 1
        %s133 = smul.addr %s132, 8
        %s134 = scalar_lea.vmem %s0, %s133
      $region28: #{down_forward.5} parent=23 // pred_fallthru
        _
    $region24: #{down_forward.5} parent=5 // pred_fallthru
      _
    %p135 = scmp.le.s32.totalorder 1, %s9
    %p136 = scmp.lt.s32.totalorder %s9, 3
    %p137 = pnand %p135, %p136
    %p138 = pneg %p137
    // Predicated region
    $region29: #{down_forward.5} parent=5 // pred_check
      _
    $region30: #{down_forward.5} parent=5 // pred_check_branch
      %140 = sbr.rel (%p137) target = $region32
    $region31: #{down_forward.5} parent=5 // pred_region
      %s141 = ssub.s32 %s9, 1
      %p142 = scmp.lt.s32.totalorder %s14, 1
      %s143 = scalar_select %p142, %s14, 1
      %s144 = smul.addr %s143, 8
      %s145 = scalar_lea.vmem %s0, %s144
      %p146 = pneg %p35
      %p147 = pneg %p32
      %p148 = pneg %p56
      %p149 = pneg %p53
      %p150 = pneg %p77
      %p151 = pneg %p74
      %p152 = pneg %p103
      %p153 = pneg %p100
      %p154 = scmp.lt.s32.totalorder %s14, 1
      %s155 = scalar_select %p154, %s14, 1
      %s156 = smul.addr %s155, 8
      %s157 = scalar_lea.vmem %s3, %s156
      %p158 = scmp.lt.s32.totalorder %s14, 1
      %s159 = scalar_select %p158, %s14, 1
      %s160 = smul.addr %s159, 8
      %s161 = scalar_lea.vmem %s0, %s160
      %p162 = scmp.lt.s32.totalorder %s14, 1
      %s163 = scalar_select %p162, %s14, 1
      %s164 = smul.addr %s163, 8
      %s165 = scalar_lea.vmem %s3, %s164
      %v166 = vld [vmem:[%s161] sm:$0xff]
      %v167 = vld [vmem:[%s1] sm:$0x1]
      %v169 = vlaneseq
      %v170 = vshrl.u32 %v169, 7
      %v171 = vsub.s32 0, %v170
      %v172 = vrot.slane %v167, %v171
      %v174 = vmul.f32 %v166, %v172
      %v175 = vld [vmem:[%s2] sm:$0x1]
      %v177 = vlaneseq
      %v178 = vshrl.u32 %v177, 7
      %v179 = vsub.s32 0, %v178
      %v180 = vrot.slane %v175, %v179
      %v182 = vadd.f32 %v174, %v180
      %v183 = vmax.f32 %v182, 0.0
      %184 = vst [vmem:[%s165] sm:$0xff] %v183
      %p185 = scmp.lt.s32.totalorder %s14, 1
      %s186 = scalar_select %p185, %s14, 1
      %s187 = smul.addr %s186, 8
      %s188 = scalar_lea.vmem %s3, %s187
      // Predicated region
      $region33: #{down_forward.5} parent=31 // pred_check
        %p189 = pneg %p100
      $region34: #{down_forward.5} parent=31 // pred_check_branch
        %191 = sbr.rel (%p189) target = $region36
      $region35: #{down_forward.5} parent=31 // pred_region
        _
      $region36: #{down_forward.5} parent=31 // pred_fallthru
        _
    $region32: #{down_forward.5} parent=5 // pred_fallthru
      _
    %p192 = scmp.le.s32.totalorder 2, %s9
    // Predicated region
    $region37: #{down_forward.5} parent=5 // pred_check
      %p193 = pneg %p192
    $region38: #{down_forward.5} parent=5 // pred_check_branch
      %195 = sbr.rel (%p193) target = $region40
    $region39: #{down_forward.5} parent=5 // pred_region
      %s196 = ssub.s32 %s9, 2
      // Predicated region
      $region41: #{down_forward.5} parent=39 // pred_check
        %p197 = pneg %p106
      $region42: #{down_forward.5} parent=39 // pred_check_branch
        %199 = sbr.rel (%p197) target = $region44
      $region43: #{down_forward.5} parent=39 // pred_region
        %p200 = scmp.lt.s32.totalorder %s15, 1
        %s201 = scalar_select %p200, %s15, 1
        %s202 = smul.addr %s201, 8
        %s203 = scalar_lea.vmem %s3, %s202
      $region44: #{down_forward.5} parent=39 // pred_fallthru
        _
    $region40: #{down_forward.5} parent=5 // pred_fallthru
      _
  $region6: #{down_forward.5} parent=0 // loop_footer
    %s13 = sadd.s32 1, %s9
  $region7: #{down_forward.5} parent=0 // loop_footer_branch
    %8 = sbr.rel target = $region3
  $region8: #{down_forward.5} parent=0 // loop_exit
    _

// kernel: down_forward.3
$region0: #{down_forward.3}
  #allocation0 [shape = 'u32[]', space=smem, size = 0x4, offset = 0x4, fixed_abs, tag = 'smem constant byte address 0x4 - core index']
  #allocation1 [shape = 'u32[144,128]{1,0:T(1,128)}', space=vmem, size = 0x12000, scoped, tag = 'internal scratch']
  %s0 = inlined_call_operand.vmem [shape: f32[2,8,4], index: 0, kind: input, shape index: {}]
  %s1 = inlined_call_operand.vmem [shape: f32[2,8,4], index: 1, kind: input, shape index: {}]
  %s2 = inlined_call_operand.vmem [shape: f32[12,128], index: 2, kind: input, shape index: {}]
  %s3 = inlined_call_operand.vmem [shape: f32[2,8,128], index: 3, kind: output, shape index: {0}]
  %s4 = inlined_call_operand.vmem [shape: f32[2,2,128], index: 4, kind: output, shape index: {1}]
  %5 = xla_tuple %s3, %s4
  %s6 = sld [smem:[#allocation0]]
  $region53: #{down_forward.3} parent=0
    _
  %s8 = ssub.s32 1, %s6
  %s9 = scalar_select 0, %s8, %s6
  loop: start=0, step=1, limit=4
  $region2: #{down_forward.3} parent=0 // loop_pre_header
    _
  $region3: #{down_forward.3} parent=0 // loop_header
    %s11 = sphi 0, %s15
    %p12 = scmp.ge.s32.totalorder %s11, 4
    %s21 = sphi 0, %s23
    %s24 = sphi 0, %s21
    %s25 = sphi 0, %s24
    %s41 = sphi 0, %s25
    %s47 = sphi 0, %s49
    %s50 = sphi 0, %s47
    %s51 = sphi 0, %s50
    %s67 = sphi 0, %s51
    %s71 = sphi 0, %s71
    %s73 = sphi 0, %s71
    %s74 = sphi 0, %s73
    %s88 = sphi 0, %s74
    %s94 = sphi 0, %s96
    %s97 = sphi 0, %s94
    %s98 = sphi 0, %s97
    %s114 = sphi 0, %s98
    %s120 = sphi 0, %s122
    %s123 = sphi 0, %s120
    %s124 = sphi 0, %s123
    %s140 = sphi 0, %s124
  $region4: #{down_forward.3} parent=0 // loop_header_branch
    %14 = sbr.rel (%p12) target = $region8
  $region5: #{down_forward.3} parent=0 // loop_body
    %s16 = ssub.s32 %s11, 1
    %s17 = ssub.s32 %s11, 2
    %s18 = sadd.s32 %s11, 1
    %s19 = ssub.s32 %s11, %s18
    %p20 = scmp.eq.s32.totalorder %s19, 0
    %s22 = sadd.s32 %s21, 1
    %s23 = scalar_select %p20, %s21, %s22
    %p26 = pneg %p20
    %p27 = scmp.eq.s32.totalorder %s11, 1
    %p28 = por %p26, %p27
    %p29 = scmp.ne.s32.totalorder %s21, %s24
    %p30 = scmp.eq.s32.totalorder %s11, 0
    %p31 = por %p29, %p30
    %p32 = scmp.ne.s32.totalorder %s21, %s24
    %p33 = scmp.eq.s32.totalorder %s16, 1
    %p34 = por %p32, %p33
    %p35 = scmp.ne.s32.totalorder %s24, %s25
    %p36 = scmp.eq.s32.totalorder %s16, 0
    %p37 = por %p35, %p36
    %p38 = scmp.ne.s32.totalorder %s24, %s25
    %p39 = scmp.eq.s32.totalorder %s17, 1
    %p40 = por %p38, %p39
    %p42 = scmp.ne.s32.totalorder %s25, %s41
    %p43 = scmp.eq.s32.totalorder %s17, 0
    %p44 = por %p42, %p43
    %s45 = ssub.s32 %s11, %s18
    %p46 = scmp.eq.s32.totalorder %s45, 0
    %s48 = sadd.s32 %s47, 1
    %s49 = scalar_select %p46, %s47, %s48
    %p52 = pneg %p46
    %p53 = scmp.eq.s32.totalorder %s11, 1
    %p54 = por %p52, %p53
    %p55 = scmp.ne.s32.totalorder %s47, %s50
    %p56 = scmp.eq.s32.totalorder %s11, 0
    %p57 = por %p55, %p56
    %p58 = scmp.ne.s32.totalorder %s47, %s50
    %p59 = scmp.eq.s32.totalorder %s16, 1
    %p60 = por %p58, %p59
    %p61 = scmp.ne.s32.totalorder %s50, %s51
    %p62 = scmp.eq.s32.totalorder %s16, 0
    %p63 = por %p61, %p62
    %p64 = scmp.ne.s32.totalorder %s50, %s51
    %p65 = scmp.eq.s32.totalorder %s17, 1
    %p66 = por %p64, %p65
    %p68 = scmp.ne.s32.totalorder %s51, %s67
    %p69 = scmp.eq.s32.totalorder %s17, 0
    %p70 = por %p68, %p69
    %s72 = sadd.s32 %s71, 1
    %p75 = scmp.eq.s32.totalorder %s11, 1
    %p76 = scmp.ne.s32.totalorder %s71, %s73
    %p77 = scmp.eq.s32.totalorder %s11, 0
    %p78 = por %p76, %p77
    %p79 = scmp.ne.s32.totalorder %s71, %s73
    %p80 = scmp.eq.s32.totalorder %s16, 1
    %p81 = por %p79, %p80
    %p82 = scmp.ne.s32.totalorder %s73, %s74
    %p83 = scmp.eq.s32.totalorder %s16, 0
    %p84 = por %p82, %p83
    %p85 = scmp.ne.s32.totalorder %s73, %s74
    %p86 = scmp.eq.s32.totalorder %s17, 1
    %p87 = por %p85, %p86
    %p89 = scmp.ne.s32.totalorder %s74, %s88
    %p90 = scmp.eq.s32.totalorder %s17, 0
    %p91 = por %p89, %p90
    %s92 = ssub.s32 %s11, %s18
    %p93 = scmp.eq.s32.totalorder %s92, 0
    %s95 = sadd.s32 %s94, 1
    %s96 = scalar_select %p93, %s94, %s95
    %p99 = pneg %p93
    %p100 = scmp.eq.s32.totalorder %s11, 1
    %p101 = por %p99, %p100
    %p102 = scmp.ne.s32.totalorder %s94, %s97
    %p103 = scmp.eq.s32.totalorder %s11, 0
    %p104 = por %p102, %p103
    %p105 = scmp.ne.s32.totalorder %s94, %s97
    %p106 = scmp.eq.s32.totalorder %s16, 1
    %p107 = por %p105, %p106
    %p108 = scmp.ne.s32.totalorder %s97, %s98
    %p109 = scmp.eq.s32.totalorder %s16, 0
    %p110 = por %p108, %p109
    %p111 = scmp.ne.s32.totalorder %s97, %s98
    %p112 = scmp.eq.s32.totalorder %s17, 1
    %p113 = por %p111, %p112
    %p115 = scmp.ne.s32.totalorder %s98, %s114
    %p116 = scmp.eq.s32.totalorder %s17, 0
    %p117 = por %p115, %p116
    %s118 = ssub.s32 %s11, %s18
    %p119 = scmp.eq.s32.totalorder %s118, 0
    %s121 = sadd.s32 %s120, 1
    %s122 = scalar_select %p119, %s120, %s121
    %p125 = pneg %p119
    %p126 = scmp.eq.s32.totalorder %s11, 1
    %p127 = por %p125, %p126
    %p128 = scmp.ne.s32.totalorder %s120, %s123
    %p129 = scmp.eq.s32.totalorder %s11, 0
    %p130 = por %p128, %p129
    %p131 = scmp.ne.s32.totalorder %s120, %s123
    %p132 = scmp.eq.s32.totalorder %s16, 1
    %p133 = por %p131, %p132
    %p134 = scmp.ne.s32.totalorder %s123, %s124
    %p135 = scmp.eq.s32.totalorder %s16, 0
    %p136 = por %p134, %p135
    %p137 = scmp.ne.s32.totalorder %s123, %s124
    %p138 = scmp.eq.s32.totalorder %s17, 1
    %p139 = por %p137, %p138
    %p141 = scmp.ne.s32.totalorder %s124, %s140
    %p142 = scmp.eq.s32.totalorder %s17, 0
    %p143 = por %p141, %p142
    %p144 = scmp.le.s32.totalorder 1, %s11
    %p145 = scmp.lt.s32.totalorder %s11, 3
    %p146 = pnand %p144, %p145
    %p147 = pneg %p146
    // Predicated region
    $region9: #{down_forward.3} parent=5 // pred_check
      _
    $region10: #{down_forward.3} parent=5 // pred_check_branch
      %149 = sbr.rel (%p146) target = $region12
    $region11: #{down_forward.3} parent=5 // pred_region
      %s150 = ssub.s32 %s11, 1
      // Predicated region
      $region13: #{down_forward.3} parent=11 // pred_check
        %p151 = pneg %p84
      $region14: #{down_forward.3} parent=11 // pred_check_branch
        %153 = sbr.rel (%p151) target = $region16
      $region15: #{down_forward.3} parent=11 // pred_region
        _
      $region16: #{down_forward.3} parent=11 // pred_fallthru
        _
    $region12: #{down_forward.3} parent=5 // pred_fallthru
      _
    %p154 = scmp.lt.s32.totalorder %s11, 2
    // Predicated region
    $region17: #{down_forward.3} parent=5 // pred_check
      %p155 = pneg %p154
    $region18: #{down_forward.3} parent=5 // pred_check_branch
      %157 = sbr.rel (%p155) target = $region20
    $region19: #{down_forward.3} parent=5 // pred_region
      // Predicated region
      $region21: #{down_forward.3} parent=19 // pred_check
        %p158 = pneg %p31
      $region22: #{down_forward.3} parent=19 // pred_check_branch
        %160 = sbr.rel (%p158) target = $region24
      $region23: #{down_forward.3} parent=19 // pred_region
        %p161 = scmp.lt.s32.totalorder %s11, 1
        %s162 = scalar_select %p161, %s11, 1
        %s163 = smul.addr %s162, 8
        %s164 = scalar_lea.vmem %s0, %s163
      $region24: #{down_forward.3} parent=19 // pred_fallthru
        _
      // Predicated region
      $region25: #{down_forward.3} parent=19 // pred_check
        %p165 = pneg %p57
      $region26: #{down_forward.3} parent=19 // pred_check_branch
        %167 = sbr.rel (%p165) target = $region28
      $region27: #{down_forward.3} parent=19 // pred_region
        %p168 = scmp.lt.s32.totalorder %s11, 1
        %s169 = scalar_select %p168, %s11, 1
        %s170 = smul.addr %s169, 8
        %s171 = scalar_lea.vmem %s1, %s170
      $region28: #{down_forward.3} parent=19 // pred_fallthru
        _
    $region20: #{down_forward.3} parent=5 // pred_fallthru
      _
    %p172 = scmp.le.s32.totalorder 1, %s11
    %p173 = scmp.lt.s32.totalorder %s11, 3
    %p174 = pnand %p172, %p173
    %p175 = pneg %p174
    // Predicated region
    $region29: #{down_forward.3} parent=5 // pred_check
      _
    $region30: #{down_forward.3} parent=5 // pred_check_branch
      %177 = sbr.rel (%p174) target = $region32
    $region31: #{down_forward.3} parent=5 // pred_region
      %s178 = ssub.s32 %s11, 1
      %p179 = scmp.lt.s32.totalorder %s16, 1
      %s180 = scalar_select %p179, %s16, 1
      %s181 = smul.addr %s180, 8
      %s182 = scalar_lea.vmem %s0, %s181
      %p183 = pneg %p37
      %p184 = pneg %p34
      %p185 = scmp.lt.s32.totalorder %s16, 1
      %s186 = scalar_select %p185, %s16, 1
      %s187 = smul.addr %s186, 8
      %s188 = scalar_lea.vmem %s1, %s187
      %p189 = pneg %p63
      %p190 = pneg %p60
      %p191 = pneg %p84
      %p192 = pneg %p81
      %p193 = pneg %p110
      %p194 = pneg %p107
      %p195 = scmp.lt.s32.totalorder %s16, 1
      %s196 = scalar_select %p195, %s16, 1
      %s197 = smul.addr %s196, 8
      %s198 = scalar_lea.vmem %s3, %s197
      %p199 = pneg %p136
      %p200 = pneg %p133
      %p201 = scmp.lt.s32.totalorder %s16, 1
      %s202 = scalar_select %p201, %s16, 1
      %s203 = smul.addr %s202, 2
      %s204 = scalar_lea.vmem %s4, %s203
      %p205 = scmp.lt.s32.totalorder %s16, 1
      %s206 = scalar_select %p205, %s16, 1
      %s207 = smul.addr %s206, 8
      %s208 = scalar_lea.vmem %s0, %s207
      %p209 = scmp.lt.s32.totalorder %s16, 1
      %s210 = scalar_select %p209, %s16, 1
      %s211 = smul.addr %s210, 8
      %s212 = scalar_lea.vmem %s1, %s211
      %p213 = scmp.lt.s32.totalorder %s16, 1
      %s214 = scalar_select %p213, %s16, 1
      %s215 = smul.addr %s214, 8
      %s216 = scalar_lea.vmem %s3, %s215
      %p217 = scmp.lt.s32.totalorder %s16, 1
      %s218 = scalar_select %p217, %s16, 1
      %s219 = smul.addr %s218, 2
      %s220 = scalar_lea.vmem %s4, %s219
      %v221 = vld [vmem:[%s208] sm:$0xff]
      %v222 = vld [vmem:[%s212] sm:$0xff]
      %v223 = vmax.f32 %v221, %v222
      %v225 = vrot.slane %v223, 7
      %vm227 = vcmask 1040384
      %v228 = vsel %vm227, 0.0, %v225
      %v229 = vrot.slane %v223, 1
      %vm231 = vcmask 1046528
      %v232 = vsel %vm231, %v229, 0.0
      %233 = vrot.lane.b32.xlu0 %v223, 4
      %v234 = vpop.permute.xlu0 %233
      %237 = vrot.lane.b32.xlu0 %v232, 8
      %v238 = vpop.permute.xlu0 %237
      %vm240 = vcmask 31744
      %v241 = vsel %vm240, %v228, %v234
      %vm242 = vcmask 64512
      %v243 = vsel %vm242, %v241, %v238
      %v244 = vld [vmem:[%s2] sm:$0xff]
      %v245 = vld [vmem:[%s2 + $0x8] sm:$0xf]
      %vm246 = vcmask 97280
      %v248 = vsel %vm246, %v243, 0
      %vm250 = vcmask 1043456
      %v252 = vsel %vm250, %v245, 0
      %254 = vmatprep.subr.mxu0 0.0
      %255 = vmatpush1.msra.mxu0 0.0
      %256 = vmatprep.subr.mxu0 0.0
      %257 = vmatpush1.msra.mxu0 0.0
      %258 = vmatprep.subr.mxu0 0.0
      %259 = vmatpush1.msra.mxu0 0.0
      %260 = vmatprep.subr.mxu0 0.0
      %261 = vmatpush1.msra.mxu0 0.0
      %262 = vmatprep.subr.mxu0 0.0
      %263 = vmatpush1.msra.mxu0 0.0
      %264 = vmatprep.subr.mxu0 0.0
      %265 = vmatpush1.msra.mxu0 0.0
      %266 = vmatprep.subr.mxu0 0.0
      %267 = vmatpush1.msra.mxu0 0.0
      %268 = vmatprep.subr.mxu0 0.0
      %269 = vmatpush1.msra.mxu0 0.0
      %270 = vmatprep.subr.mxu0 0.0
      %271 = vmatpush1.msra.mxu0 0.0
      %272 = vmatprep.subr.mxu0 0.0
      %273 = vmatpush1.msra.mxu0 0.0
      %274 = vmatprep.subr.mxu0 0.0
      %275 = vmatpush1.msra.mxu0 0.0
      %276 = vmatprep.subr.mxu0 0.0
      %277 = vmatpush1.msra.mxu0 0.0
      %278 = vmatprep.subr.mxu0 0.0
      %279 = vmatpush1.msra.mxu0 0.0
      %280 = vmatprep.subr.mxu0 0.0
      %281 = vmatpush1.msra.mxu0 0.0
      %282 = vmatprep.subr.mxu0 0.0
      %283 = vmatpush1.msra.mxu0 %v252
      %284 = vmatprep.subr.mxu0 0.0
      %285 = vmatpush1.msra.mxu0 %v244
      %286 = vmatprep.subr.mxu0 0.0
      %287 = vmatpush2.msra.mxu0 0.0
      %288 = vmatprep.subr.mxu0 0.0
      %289 = vmatpush2.msra.mxu0 0.0
      %290 = vmatprep.subr.mxu0 0.0
      %291 = vmatpush2.msra.mxu0 0.0
      %292 = vmatprep.subr.mxu0 0.0
      %293 = vmatpush2.msra.mxu0 0.0
      %294 = vmatprep.subr.mxu0 0.0
      %295 = vmatpush2.msra.mxu0 0.0
      %296 = vmatprep.subr.mxu0 0.0
      %297 = vmatpush2.msra.mxu0 0.0
      %298 = vmatprep.subr.mxu0 0.0
      %299 = vmatpush2.msra.mxu0 0.0
      %300 = vmatprep.subr.mxu0 0.0
      %301 = vmatpush2.msra.mxu0 0.0
      %302 = vmatprep.subr.mxu0 0.0
      %303 = vmatpush2.msra.mxu0 0.0
      %304 = vmatprep.subr.mxu0 0.0
      %305 = vmatpush2.msra.mxu0 0.0
      %306 = vmatprep.subr.mxu0 0.0
      %307 = vmatpush2.msra.mxu0 0.0
      %308 = vmatprep.subr.mxu0 0.0
      %309 = vmatpush2.msra.mxu0 0.0
      %310 = vmatprep.subr.mxu0 0.0
      %311 = vmatpush2.msra.mxu0 0.0
      %312 = vmatprep.subr.mxu0 0.0
      %313 = vmatpush2.msra.mxu0 0.0
      %314 = vmatprep.subr.mxu0 0.0
      %315 = vmatpush2.msra.mxu0 0.0
      %316 = vmatprep.subr.mxu0 0.0
      %317 = vmatpush2.msra.mxu0 0.0
      %318 = vmatprep.mubr.f32.mxu0 0.0
      %319 = vmatmul.mubr.f32.gmra.mxu0 %v248
      %v320 = vpop.f32.mrf.mxu0
      %v321 = vadd.f32 0.0, %v320
      %v322 = vpop.f32.mrf.mxu0
      %323 = vdwg.mxu0
      %324 = vst [vmem:[%s216] sm:$0xff] %v321
      %v325 = vrot.slane %v321, 4
      %v326 = vadd.f32 %v321, %v325
      %v327 = vrot.slane %v326, 2
      %v328 = vadd.f32 %v326, %v327
      %v329 = vrot.slane %v328, 1
      %v330 = vadd.f32 %v328, %v329
      %v331 = vmul.f32 %v321, %v321
      %v332 = vrot.slane %v331, 4
      %v333 = vadd.f32 %v331, %v332
      %v334 = vrot.slane %v333, 2
      %v335 = vadd.f32 %v333, %v334
      %v336 = vrot.slane %v335, 1
      %v337 = vadd.f32 %v335, %v336
      %v338 = vsel %vm227, %v330, %v337
      %339 = vst [vmem:[%s220] sm:$0x3] %v338
      %p340 = scmp.lt.s32.totalorder %s16, 1
      %s341 = scalar_select %p340, %s16, 1
      %s342 = smul.addr %s341, 8
      %s343 = scalar_lea.vmem %s3, %s342
      %p344 = scmp.lt.s32.totalorder %s16, 1
      %s345 = scalar_select %p344, %s16, 1
      %s346 = smul.addr %s345, 2
      %s347 = scalar_lea.vmem %s4, %s346
      // Predicated region
      $region33: #{down_forward.3} parent=31 // pred_check
        %p348 = pneg %p107
      $region34: #{down_forward.3} parent=31 // pred_check_branch
        %350 = sbr.rel (%p348) target = $region36
      $region35: #{down_forward.3} parent=31 // pred_region
        _
      $region36: #{down_forward.3} parent=31 // pred_fallthru
        _
      // Predicated region
      $region37: #{down_forward.3} parent=31 // pred_check
        %p351 = pneg %p133
      $region38: #{down_forward.3} parent=31 // pred_check_branch
        %353 = sbr.rel (%p351) target = $region40
      $region39: #{down_forward.3} parent=31 // pred_region
        _
      $region40: #{down_forward.3} parent=31 // pred_fallthru
        _
    $region32: #{down_forward.3} parent=5 // pred_fallthru
      _
    %p354 = scmp.le.s32.totalorder 2, %s11
    // Predicated region
    $region41: #{down_forward.3} parent=5 // pred_check
      %p355 = pneg %p354
    $region42: #{down_forward.3} parent=5 // pred_check_branch
      %357 = sbr.rel (%p355) target = $region44
    $region43: #{down_forward.3} parent=5 // pred_region
      %s358 = ssub.s32 %s11, 2
      // Predicated region
      $region45: #{down_forward.3} parent=43 // pred_check
        %p359 = pneg %p113
      $region46: #{down_forward.3} parent=43 // pred_check_branch
        %361 = sbr.rel (%p359) target = $region48
      $region47: #{down_forward.3} parent=43 // pred_region
        %p362 = scmp.lt.s32.totalorder %s17, 1
        %s363 = scalar_select %p362, %s17, 1
        %s364 = smul.addr %s363, 8
        %s365 = scalar_lea.vmem %s3, %s364
      $region48: #{down_forward.3} parent=43 // pred_fallthru
        _
      // Predicated region
      $region49: #{down_forward.3} parent=43 // pred_check
        %p366 = pneg %p139
      $region50: #{down_forward.3} parent=43 // pred_check_branch
        %368 = sbr.rel (%p366) target = $region52
      $region51: #{down_forward.3} parent=43 // pred_region
        %p369 = scmp.lt.s32.totalorder %s17, 1
        %s370 = scalar_select %p369, %s17, 1
        %s371 = smul.addr %s370, 2
        %s372 = scalar_lea.vmem %s4, %s371
      $region52: #{down_forward.3} parent=43 // pred_fallthru
        _
    $region44: #{down_forward.3} parent=5 // pred_fallthru
      _
  $region6: #{down_forward.3} parent=0 // loop_footer
    %s15 = sadd.s32 1, %s11
  $region7: #{down_forward.3} parent=0 // loop_footer_branch
    %10 = sbr.rel target = $region3
  $region8: #{down_forward.3} parent=0 // loop_exit
    _

// kernel: down_forward.4
$region0: #{down_forward.4}
  #allocation0 [shape = 'u32[]', space=smem, size = 0x4, offset = 0x4, fixed_abs, tag = 'smem constant byte address 0x4 - core index']
  #allocation1 [shape = 'u32[144,128]{1,0:T(1,128)}', space=vmem, size = 0x12000, scoped, tag = 'internal scratch']
  %s0 = inlined_call_operand.vmem [shape: f32[2,8,128], index: 0, kind: input, shape index: {}]
  %s1 = inlined_call_operand.vmem [shape: f32[1,128], index: 1, kind: input, shape index: {}]
  %s2 = inlined_call_operand.vmem [shape: f32[1,128], index: 2, kind: input, shape index: {}]
  %s3 = inlined_call_operand.vmem [shape: f32[384,128], index: 3, kind: input, shape index: {}]
  %s4 = inlined_call_operand.vmem [shape: f32[2,8,128], index: 4, kind: output, shape index: {0}]
  %s5 = inlined_call_operand.vmem [shape: f32[2,2,128], index: 5, kind: output, shape index: {1}]
  %6 = xla_tuple %s4, %s5
  %s7 = sld [smem:[#allocation0]]
  $region57: #{down_forward.4} parent=0
    _
  %s9 = ssub.s32 1, %s7
  %s10 = scalar_select 0, %s9, %s7
  loop: start=0, step=1, limit=4
  $region2: #{down_forward.4} parent=0 // loop_pre_header
    _
  $region3: #{down_forward.4} parent=0 // loop_header
    %s12 = sphi 0, %s16
    %p13 = scmp.ge.s32.totalorder %s12, 4
    %s22 = sphi 0, %s24
    %s25 = sphi 0, %s22
    %s26 = sphi 0, %s25
    %s42 = sphi 0, %s26
    %s46 = sphi 0, %s46
    %s48 = sphi 0, %s46
    %s49 = sphi 0, %s48
    %s63 = sphi 0, %s49
    %s67 = sphi 0, %s67
    %s69 = sphi 0, %s67
    %s70 = sphi 0, %s69
    %s84 = sphi 0, %s70
    %s88 = sphi 0, %s88
    %s90 = sphi 0, %s88
    %s91 = sphi 0, %s90
    %s105 = sphi 0, %s91
    %s111 = sphi 0, %s113
    %s114 = sphi 0, %s111
    %s115 = sphi 0, %s114
    %s131 = sphi 0, %s115
    %s137 = sphi 0, %s139
    %s140 = sphi 0, %s137
    %s141 = sphi 0, %s140
    %s157 = sphi 0, %s141
  $region4: #{down_forward.4} parent=0 // loop_header_branch
    %15 = sbr.rel (%p13) target = $region8
  $region5: #{down_forward.4} parent=0 // loop_body
    %s17 = ssub.s32 %s12, 1
    %s18 = ssub.s32 %s12, 2
    %s19 = sadd.s32 %s12, 1
    %s20 = ssub.s32 %s12, %s19
    %p21 = scmp.eq.s32.totalorder %s20, 0
    %s23 = sadd.s32 %s22, 1
    %s24 = scalar_select %p21, %s22, %s23
    %p27 = pneg %p21
    %p28 = scmp.eq.s32.totalorder %s12, 1
    %p29 = por %p27, %p28
    %p30 = scmp.ne.s32.totalorder %s22, %s25
    %p31 = scmp.eq.s32.totalorder %s12, 0
    %p32 = por %p30, %p31
    %p33 = scmp.ne.s32.totalorder %s22, %s25
    %p34 = scmp.eq.s32.totalorder %s17, 1
    %p35 = por %p33, %p34
    %p36 = scmp.ne.s32.totalorder %s25, %s26
    %p37 = scmp.eq.s32.totalorder %s17, 0
    %p38 = por %p36, %p37
    %p39 = scmp.ne.s32.totalorder %s25, %s26
    %p40 = scmp.eq.s32.totalorder %s18, 1
    %p41 = por %p39, %p40
    %p43 = scmp.ne.s32.totalorder %s26, %s42
    %p44 = scmp.eq.s32.totalorder %s18, 0
    %p45 = por %p43, %p44
    %s47 = sadd.s32 %s46, 1
    %p50 = scmp.eq.s32.totalorder %s12, 1
    %p51 = scmp.ne.s32.totalorder %s46, %s48
    %p52 = scmp.eq.s32.totalorder %s12, 0
    %p53 = por %p51, %p52
    %p54 = scmp.ne.s32.totalorder %s46, %s48
    %p55 = scmp.eq.s32.totalorder %s17, 1
    %p56 = por %p54, %p55
    %p57 = scmp.ne.s32.totalorder %s48, %s49
    %p58 = scmp.eq.s32.totalorder %s17, 0
    %p59 = por %p57, %p58
    %p60 = scmp.ne.s32.totalorder %s48, %s49
    %p61 = scmp.eq.s32.totalorder %s18, 1
    %p62 = por %p60, %p61
    %p64 = scmp.ne.s32.totalorder %s49, %s63
    %p65 = scmp.eq.s32.totalorder %s18, 0
    %p66 = por %p64, %p65
    %s68 = sadd.s32 %s67, 1
    %p71 = scmp.eq.s32.totalorder %s12, 1
    %p72 = scmp.ne.s32.totalorder %s67, %s69
    %p73 = scmp.eq.s32.totalorder %s12, 0
    %p74 = por %p72, %p73
    %p75 = scmp.ne.s32.totalorder %s67, %s69
    %p76 = scmp.eq.s32.totalorder %s17, 1
    %p77 = por %p75, %p76
    %p78 = scmp.ne.s32.totalorder %s69, %s70
    %p79 = scmp.eq.s32.totalorder %s17, 0
    %p80 = por %p78, %p79
    %p81 = scmp.ne.s32.totalorder %s69, %s70
    %p82 = scmp.eq.s32.totalorder %s18, 1
    %p83 = por %p81, %p82
    %p85 = scmp.ne.s32.totalorder %s70, %s84
    %p86 = scmp.eq.s32.totalorder %s18, 0
    %p87 = por %p85, %p86
    %s89 = sadd.s32 %s88, 1
    %p92 = scmp.eq.s32.totalorder %s12, 1
    %p93 = scmp.ne.s32.totalorder %s88, %s90
    %p94 = scmp.eq.s32.totalorder %s12, 0
    %p95 = por %p93, %p94
    %p96 = scmp.ne.s32.totalorder %s88, %s90
    %p97 = scmp.eq.s32.totalorder %s17, 1
    %p98 = por %p96, %p97
    %p99 = scmp.ne.s32.totalorder %s90, %s91
    %p100 = scmp.eq.s32.totalorder %s17, 0
    %p101 = por %p99, %p100
    %p102 = scmp.ne.s32.totalorder %s90, %s91
    %p103 = scmp.eq.s32.totalorder %s18, 1
    %p104 = por %p102, %p103
    %p106 = scmp.ne.s32.totalorder %s91, %s105
    %p107 = scmp.eq.s32.totalorder %s18, 0
    %p108 = por %p106, %p107
    %s109 = ssub.s32 %s12, %s19
    %p110 = scmp.eq.s32.totalorder %s109, 0
    %s112 = sadd.s32 %s111, 1
    %s113 = scalar_select %p110, %s111, %s112
    %p116 = pneg %p110
    %p117 = scmp.eq.s32.totalorder %s12, 1
    %p118 = por %p116, %p117
    %p119 = scmp.ne.s32.totalorder %s111, %s114
    %p120 = scmp.eq.s32.totalorder %s12, 0
    %p121 = por %p119, %p120
    %p122 = scmp.ne.s32.totalorder %s111, %s114
    %p123 = scmp.eq.s32.totalorder %s17, 1
    %p124 = por %p122, %p123
    %p125 = scmp.ne.s32.totalorder %s114, %s115
    %p126 = scmp.eq.s32.totalorder %s17, 0
    %p127 = por %p125, %p126
    %p128 = scmp.ne.s32.totalorder %s114, %s115
    %p129 = scmp.eq.s32.totalorder %s18, 1
    %p130 = por %p128, %p129
    %p132 = scmp.ne.s32.totalorder %s115, %s131
    %p133 = scmp.eq.s32.totalorder %s18, 0
    %p134 = por %p132, %p133
    %s135 = ssub.s32 %s12, %s19
    %p136 = scmp.eq.s32.totalorder %s135, 0
    %s138 = sadd.s32 %s137, 1
    %s139 = scalar_select %p136, %s137, %s138
    %p142 = pneg %p136
    %p143 = scmp.eq.s32.totalorder %s12, 1
    %p144 = por %p142, %p143
    %p145 = scmp.ne.s32.totalorder %s137, %s140
    %p146 = scmp.eq.s32.totalorder %s12, 0
    %p147 = por %p145, %p146
    %p148 = scmp.ne.s32.totalorder %s137, %s140
    %p149 = scmp.eq.s32.totalorder %s17, 1
    %p150 = por %p148, %p149
    %p151 = scmp.ne.s32.totalorder %s140, %s141
    %p152 = scmp.eq.s32.totalorder %s17, 0
    %p153 = por %p151, %p152
    %p154 = scmp.ne.s32.totalorder %s140, %s141
    %p155 = scmp.eq.s32.totalorder %s18, 1
    %p156 = por %p154, %p155
    %p158 = scmp.ne.s32.totalorder %s141, %s157
    %p159 = scmp.eq.s32.totalorder %s18, 0
    %p160 = por %p158, %p159
    %p161 = scmp.le.s32.totalorder 1, %s12
    %p162 = scmp.lt.s32.totalorder %s12, 3
    %p163 = pnand %p161, %p162
    %p164 = pneg %p163
    // Predicated region
    $region9: #{down_forward.4} parent=5 // pred_check
      _
    $region10: #{down_forward.4} parent=5 // pred_check_branch
      %166 = sbr.rel (%p163) target = $region12
    $region11: #{down_forward.4} parent=5 // pred_region
      %s167 = ssub.s32 %s12, 1
      // Predicated region
      $region13: #{down_forward.4} parent=11 // pred_check
        %p168 = pneg %p59
      $region14: #{down_forward.4} parent=11 // pred_check_branch
        %170 = sbr.rel (%p168) target = $region16
      $region15: #{down_forward.4} parent=11 // pred_region
        _
      $region16: #{down_forward.4} parent=11 // pred_fallthru
        _
      // Predicated region
      $region17: #{down_forward.4} parent=11 // pred_check
        %p171 = pneg %p80
      $region18: #{down_forward.4} parent=11 // pred_check_branch
        %173 = sbr.rel (%p171) target = $region20
      $region19: #{down_forward.4} parent=11 // pred_region
        _
      $region20: #{down_forward.4} parent=11 // pred_fallthru
        _
      // Predicated region
      $region21: #{down_forward.4} parent=11 // pred_check
        %p174 = pneg %p101
      $region22: #{down_forward.4} parent=11 // pred_check_branch
        %176 = sbr.rel (%p174) target = $region24
      $region23: #{down_forward.4} parent=11 // pred_region
        _
      $region24: #{down_forward.4} parent=11 // pred_fallthru
        _
    $region12: #{down_forward.4} parent=5 // pred_fallthru
      _
    %p177 = scmp.lt.s32.totalorder %s12, 2
    // Predicated region
    $region25: #{down_forward.4} parent=5 // pred_check
      %p178 = pneg %p177
    $region26: #{down_forward.4} parent=5 // pred_check_branch
      %180 = sbr.rel (%p178) target = $region28
    $region27: #{down_forward.4} parent=5 // pred_region
      // Predicated region
      $region29: #{down_forward.4} parent=27 // pred_check
        %p181 = pneg %p32
      $region30: #{down_forward.4} parent=27 // pred_check_branch
        %183 = sbr.rel (%p181) target = $region32
      $region31: #{down_forward.4} parent=27 // pred_region
        %p184 = scmp.lt.s32.totalorder %s12, 1
        %s185 = scalar_select %p184, %s12, 1
        %s186 = smul.addr %s185, 8
        %s187 = scalar_lea.vmem %s0, %s186
      $region32: #{down_forward.4} parent=27 // pred_fallthru
        _
    $region28: #{down_forward.4} parent=5 // pred_fallthru
      _
    %p188 = scmp.le.s32.totalorder 1, %s12
    %p189 = scmp.lt.s32.totalorder %s12, 3
    %p190 = pnand %p188, %p189
    %p191 = pneg %p190
    // Predicated region
    $region33: #{down_forward.4} parent=5 // pred_check
      _
    $region34: #{down_forward.4} parent=5 // pred_check_branch
      %193 = sbr.rel (%p190) target = $region36
    $region35: #{down_forward.4} parent=5 // pred_region
      %s194 = ssub.s32 %s12, 1
      %p195 = scmp.lt.s32.totalorder %s17, 1
      %s196 = scalar_select %p195, %s17, 1
      %s197 = smul.addr %s196, 8
      %s198 = scalar_lea.vmem %s0, %s197
      %p199 = pneg %p38
      %p200 = pneg %p35
      %p201 = pneg %p59
      %p202 = pneg %p56
      %p203 = pneg %p80
      %p204 = pneg %p77
      %p205 = pneg %p101
      %p206 = pneg %p98
      %p207 = pneg %p127
      %p208 = pneg %p124
      %p209 = scmp.lt.s32.totalorder %s17, 1
      %s210 = scalar_select %p209, %s17, 1
      %s211 = smul.addr %s210, 8
      %s212 = scalar_lea.vmem %s4, %s211
      %p213 = pneg %p153
      %p214 = pneg %p150
      %p215 = scmp.lt.s32.totalorder %s17, 1
      %s216 = scalar_select %p215, %s17, 1
      %s217 = smul.addr %s216, 2
      %s218 = scalar_lea.vmem %s5, %s217
      %p219 = scmp.lt.s32.totalorder %s17, 1
      %s220 = scalar_select %p219, %s17, 1
      %s221 = smul.addr %s220, 8
      %s222 = scalar_lea.vmem %s0, %s221
      %p223 = scmp.lt.s32.totalorder %s17, 1
      %s224 = scalar_select %p223, %s17, 1
      %s225 = smul.addr %s224, 8
      %s226 = scalar_lea.vmem %s4, %s225
      %p227 = scmp.lt.s32.totalorder %s17, 1
      %s228 = scalar_select %p227, %s17, 1
      %s229 = smul.addr %s228, 2
      %s230 = scalar_lea.vmem %s5, %s229
      %v231 = vld [vmem:[%s222] sm:$0xff]
      %v232 = vld [vmem:[%s1] sm:$0x1]
      %v234 = vlaneseq
      %v235 = vshrl.u32 %v234, 7
      %v236 = vsub.s32 0, %v235
      %v237 = vrot.slane %v232, %v236
      %v239 = vmul.f32 %v231, %v237
      %v240 = vld [vmem:[%s2] sm:$0x1]
      %v242 = vlaneseq
      %v243 = vshrl.u32 %v242, 7
      %v244 = vsub.s32 0, %v243
      %v245 = vrot.slane %v240, %v244
      %v247 = vadd.f32 %v239, %v245
      %v248 = vmax.f32 %v247, 0.0
      %v250 = vrot.slane %v248, 7
      %vm252 = vcmask 1040384
      %v253 = vsel %vm252, 0.0, %v250
      %v254 = vrot.slane %v248, 1
      %vm256 = vcmask 1046528
      %v257 = vsel %vm256, %v254, 0.0
      %v258 = vld [vmem:[%s3] sm:$0xff]
      %v259 = vld [vmem:[%s3 + $0x8] sm:$0xff]
      %v260 = vld [vmem:[%s3 + $0x10] sm:$0xff]
      %v261 = vld [vmem:[%s3 + $0x18] sm:$0xff]
      %v262 = vld [vmem:[%s3 + $0x20] sm:$0xff]
      %v263 = vld [vmem:[%s3 + $0x28] sm:$0xff]
      %v264 = vld [vmem:[%s3 + $0x30] sm:$0xff]
      %v265 = vld [vmem:[%s3 + $0x38] sm:$0xff]
      %v266 = vld [vmem:[%s3 + $0x40] sm:$0xff]
      %v267 = vld [vmem:[%s3 + $0x48] sm:$0xff]
      %v268 = vld [vmem:[%s3 + $0x50] sm:$0xff]
      %v269 = vld [vmem:[%s3 + $0x58] sm:$0xff]
      %v270 = vld [vmem:[%s3 + $0x60] sm:$0xff]
      %v271 = vld [vmem:[%s3 + $0x68] sm:$0xff]
      %v272 = vld [vmem:[%s3 + $0x70] sm:$0xff]
      %v273 = vld [vmem:[%s3 + $0x78] sm:$0xff]
      %v274 = vld [vmem:[%s3 + $0x80] sm:$0xff]
      %v275 = vld [vmem:[%s3 + $0x88] sm:$0xff]
      %v276 = vld [vmem:[%s3 + $0x90] sm:$0xff]
      %v277 = vld [vmem:[%s3 + $0x98] sm:$0xff]
      %v278 = vld [vmem:[%s3 + $0xa0] sm:$0xff]
      %v279 = vld [vmem:[%s3 + $0xa8] sm:$0xff]
      %v280 = vld [vmem:[%s3 + $0xb0] sm:$0xff]
      %v281 = vld [vmem:[%s3 + $0xb8] sm:$0xff]
      %v282 = vld [vmem:[%s3 + $0xc0] sm:$0xff]
      %v283 = vld [vmem:[%s3 + $0xc8] sm:$0xff]
      %v284 = vld [vmem:[%s3 + $0xd0] sm:$0xff]
      %v285 = vld [vmem:[%s3 + $0xd8] sm:$0xff]
      %v286 = vld [vmem:[%s3 + $0xe0] sm:$0xff]
      %v287 = vld [vmem:[%s3 + $0xe8] sm:$0xff]
      %v288 = vld [vmem:[%s3 + $0xf0] sm:$0xff]
      %v289 = vld [vmem:[%s3 + $0xf8] sm:$0xff]
      %v290 = vld [vmem:[%s3 + $0x100] sm:$0xff]
      %v291 = vld [vmem:[%s3 + $0x108] sm:$0xff]
      %v292 = vld [vmem:[%s3 + $0x110] sm:$0xff]
      %v293 = vld [vmem:[%s3 + $0x118] sm:$0xff]
      %v294 = vld [vmem:[%s3 + $0x120] sm:$0xff]
      %v295 = vld [vmem:[%s3 + $0x128] sm:$0xff]
      %v296 = vld [vmem:[%s3 + $0x130] sm:$0xff]
      %v297 = vld [vmem:[%s3 + $0x138] sm:$0xff]
      %v298 = vld [vmem:[%s3 + $0x140] sm:$0xff]
      %v299 = vld [vmem:[%s3 + $0x148] sm:$0xff]
      %v300 = vld [vmem:[%s3 + $0x150] sm:$0xff]
      %v301 = vld [vmem:[%s3 + $0x158] sm:$0xff]
      %v302 = vld [vmem:[%s3 + $0x160] sm:$0xff]
      %v303 = vld [vmem:[%s3 + $0x168] sm:$0xff]
      %v304 = vld [vmem:[%s3 + $0x170] sm:$0xff]
      %v305 = vld [vmem:[%s3 + $0x178] sm:$0xff]
      %306 = vmatprep.subr.mxu0 0.0
      %307 = vmatpush1.msra.mxu0 %v273
      %308 = vmatprep.subr.mxu0 0.0
      %309 = vmatpush1.msra.mxu0 %v272
      %310 = vmatprep.subr.mxu0 0.0
      %311 = vmatpush1.msra.mxu0 %v271
      %312 = vmatprep.subr.mxu0 0.0
      %313 = vmatpush1.msra.mxu0 %v270
      %314 = vmatprep.subr.mxu0 0.0
      %315 = vmatpush1.msra.mxu0 %v269
      %316 = vmatprep.subr.mxu0 0.0
      %317 = vmatpush1.msra.mxu0 %v268
      %318 = vmatprep.subr.mxu0 0.0
      %319 = vmatpush1.msra.mxu0 %v267
      %320 = vmatprep.subr.mxu0 0.0
      %321 = vmatpush1.msra.mxu0 %v266
      %322 = vmatprep.subr.mxu0 0.0
      %323 = vmatpush1.msra.mxu0 %v265
      %324 = vmatprep.subr.mxu0 0.0
      %325 = vmatpush1.msra.mxu0 %v264
      %326 = vmatprep.subr.mxu0 0.0
      %327 = vmatpush1.msra.mxu0 %v263
      %328 = vmatprep.subr.mxu0 0.0
      %329 = vmatpush1.msra.mxu0 %v262
      %330 = vmatprep.subr.mxu0 0.0
      %331 = vmatpush1.msra.mxu0 %v261
      %332 = vmatprep.subr.mxu0 0.0
      %333 = vmatpush1.msra.mxu0 %v260
      %334 = vmatprep.subr.mxu0 0.0
      %335 = vmatpush1.msra.mxu0 %v259
      %336 = vmatprep.subr.mxu0 0.0
      %337 = vmatpush1.msra.mxu0 %v258
      %338 = vmatprep.subr.mxu0 0.0
      %339 = vmatpush2.msra.mxu0 %v289
      %340 = vmatprep.subr.mxu0 0.0
      %341 = vmatpush2.msra.mxu0 %v288
      %342 = vmatprep.subr.mxu0 0.0
      %343 = vmatpush2.msra.mxu0 %v287
      %344 = vmatprep.subr.mxu0 0.0
      %345 = vmatpush2.msra.mxu0 %v286
      %346 = vmatprep.subr.mxu0 0.0
      %347 = vmatpush2.msra.mxu0 %v285
      %348 = vmatprep.subr.mxu0 0.0
      %349 = vmatpush2.msra.mxu0 %v284
      %350 = vmatprep.subr.mxu0 0.0
      %351 = vmatpush2.msra.mxu0 %v283
      %352 = vmatprep.subr.mxu0 0.0
      %353 = vmatpush2.msra.mxu0 %v282
      %354 = vmatprep.subr.mxu0 0.0
      %355 = vmatpush2.msra.mxu0 %v281
      %356 = vmatprep.subr.mxu0 0.0
      %357 = vmatpush2.msra.mxu0 %v280
      %358 = vmatprep.subr.mxu0 0.0
      %359 = vmatpush2.msra.mxu0 %v279
      %360 = vmatprep.subr.mxu0 0.0
      %361 = vmatpush2.msra.mxu0 %v278
      %362 = vmatprep.subr.mxu0 0.0
      %363 = vmatpush2.msra.mxu0 %v277
      %364 = vmatprep.subr.mxu0 0.0
      %365 = vmatpush2.msra.mxu0 %v276
      %366 = vmatprep.subr.mxu0 0.0
      %367 = vmatpush2.msra.mxu0 %v275
      %368 = vmatprep.subr.mxu0 0.0
      %369 = vmatpush2.msra.mxu0 %v274
      %370 = vmatprep.mubr.f32.mxu0 %v248
      %371 = vmatmul.mubr.f32.gmra.mxu0 %v253
      %v372 = vpop.f32.mrf.mxu0
      %v373 = vadd.f32 0.0, %v372
      %v374 = vpop.f32.mrf.mxu0
      %375 = vdwg.mxu0
      %376 = vmatprep.subr.mxu0 0.0
      %377 = vmatpush1.msra.mxu0 %v305
      %378 = vmatprep.subr.mxu0 0.0
      %379 = vmatpush1.msra.mxu0 %v304
      %380 = vmatprep.subr.mxu0 0.0
      %381 = vmatpush1.msra.mxu0 %v303
      %382 = vmatprep.subr.mxu0 0.0
      %383 = vmatpush1.msra.mxu0 %v302
      %384 = vmatprep.subr.mxu0 0.0
      %385 = vmatpush1.msra.mxu0 %v301
      %386 = vmatprep.subr.mxu0 0.0
      %387 = vmatpush1.msra.mxu0 %v300
      %388 = vmatprep.subr.mxu0 0.0
      %389 = vmatpush1.msra.mxu0 %v299
      %390 = vmatprep.subr.mxu0 0.0
      %391 = vmatpush1.msra.mxu0 %v298
      %392 = vmatprep.subr.mxu0 0.0
      %393 = vmatpush1.msra.mxu0 %v297
      %394 = vmatprep.subr.mxu0 0.0
      %395 = vmatpush1.msra.mxu0 %v296
      %396 = vmatprep.subr.mxu0 0.0
      %397 = vmatpush1.msra.mxu0 %v295
      %398 = vmatprep.subr.mxu0 0.0
      %399 = vmatpush1.msra.mxu0 %v294
      %400 = vmatprep.subr.mxu0 0.0
      %401 = vmatpush1.msra.mxu0 %v293
      %402 = vmatprep.subr.mxu0 0.0
      %403 = vmatpush1.msra.mxu0 %v292
      %404 = vmatprep.subr.mxu0 0.0
      %405 = vmatpush1.msra.mxu0 %v291
      %406 = vmatprep.subr.mxu0 0.0
      %407 = vmatpush1.msra.mxu0 %v290
      %408 = vmatprep.subr.mxu0 0.0
      %409 = vmatpush2.msra.mxu0 0.0
      %410 = vmatprep.subr.mxu0 0.0
      %411 = vmatpush2.msra.mxu0 0.0
      %412 = vmatprep.subr.mxu0 0.0
      %413 = vmatpush2.msra.mxu0 0.0
      %414 = vmatprep.subr.mxu0 0.0
      %415 = vmatpush2.msra.mxu0 0.0
      %416 = vmatprep.subr.mxu0 0.0
      %417 = vmatpush2.msra.mxu0 0.0
      %418 = vmatprep.subr.mxu0 0.0
      %419 = vmatpush2.msra.mxu0 0.0
      %420 = vmatprep.subr.mxu0 0.0
      %421 = vmatpush2.msra.mxu0 0.0
      %422 = vmatprep.subr.mxu0 0.0
      %423 = vmatpush2.msra.mxu0 0.0
      %424 = vmatprep.subr.mxu0 0.0
      %425 = vmatpush2.msra.mxu0 0.0
      %426 = vmatprep.subr.mxu0 0.0
      %427 = vmatpush2.msra.mxu0 0.0
      %428 = vmatprep.subr.mxu0 0.0
      %429 = vmatpush2.msra.mxu0 0.0
      %430 = vmatprep.subr.mxu0 0.0
      %431 = vmatpush2.msra.mxu0 0.0
      %432 = vmatprep.subr.mxu0 0.0
      %433 = vmatpush2.msra.mxu0 0.0
      %434 = vmatprep.subr.mxu0 0.0
      %435 = vmatpush2.msra.mxu0 0.0
      %436 = vmatprep.subr.mxu0 0.0
      %437 = vmatpush2.msra.mxu0 0.0
      %438 = vmatprep.subr.mxu0 0.0
      %439 = vmatpush2.msra.mxu0 0.0
      %440 = vmatprep.mubr.f32.mxu0 0.0
      %441 = vmatmul.mubr.f32.gmra.mxu0 %v257
      %v442 = vpop.f32.mrf.mxu0
      %v443 = vadd.f32 %v373, %v442
      %v444 = vpop.f32.mrf.mxu0
      %445 = vdwg.mxu0
      %446 = vst [vmem:[%s226] sm:$0xff] %v443
      %v447 = vrot.slane %v443, 4
      %v448 = vadd.f32 %v443, %v447
      %v449 = vrot.slane %v448, 2
      %v450 = vadd.f32 %v448, %v449
      %v451 = vrot.slane %v450, 1
      %v452 = vadd.f32 %v450, %v451
      %v453 = vmul.f32 %v443, %v443
      %v454 = vrot.slane %v453, 4
      %v455 = vadd.f32 %v453, %v454
      %v456 = vrot.slane %v455, 2
      %v457 = vadd.f32 %v455, %v456
      %v458 = vrot.slane %v457, 1
      %v459 = vadd.f32 %v457, %v458
      %v460 = vsel %vm252, %v452, %v459
      %461 = vst [vmem:[%s230] sm:$0x3] %v460
      %p462 = scmp.lt.s32.totalorder %s17, 1
      %s463 = scalar_select %p462, %s17, 1
      %s464 = smul.addr %s463, 8
      %s465 = scalar_lea.vmem %s4, %s464
      %p466 = scmp.lt.s32.totalorder %s17, 1
      %s467 = scalar_select %p466, %s17, 1
      %s468 = smul.addr %s467, 2
      %s469 = scalar_lea.vmem %s5, %s468
      // Predicated region
      $region37: #{down_forward.4} parent=35 // pred_check
        %p470 = pneg %p124
      $region38: #{down_forward.4} parent=35 // pred_check_branch
        %472 = sbr.rel (%p470) target = $region40
      $region39: #{down_forward.4} parent=35 // pred_region
        _
      $region40: #{down_forward.4} parent=35 // pred_fallthru
        _
      // Predicated region
      $region41: #{down_forward.4} parent=35 // pred_check
        %p473 = pneg %p150
      $region42: #{down_forward.4} parent=35 // pred_check_branch
        %475 = sbr.rel (%p473) target = $region44
      $region43: #{down_forward.4} parent=35 // pred_region
        _
      $region44: #{down_forward.4} parent=35 // pred_fallthru
        _
    $region36: #{down_forward.4} parent=5 // pred_fallthru
      _
    %p476 = scmp.le.s32.totalorder 2, %s12
    // Predicated region
    $region45: #{down_forward.4} parent=5 // pred_check
      %p477 = pneg %p476
    $region46: #{down_forward.4} parent=5 // pred_check_branch
      %479 = sbr.rel (%p477) target = $region48
    $region47: #{down_forward.4} parent=5 // pred_region
      %s480 = ssub.s32 %s12, 2
      // Predicated region
      $region49: #{down_forward.4} parent=47 // pred_check
        %p481 = pneg %p130
      $region50: #{down_forward.4} parent=47 // pred_check_branch
        %483 = sbr.rel (%p481) target = $region52
      $region51: #{down_forward.4} parent=47 // pred_region
        %p484 = scmp.lt.s32.totalorder %s18, 1
        %s485 = scalar_select %p484, %s18, 1
        %s486 = smul.addr %s485, 8
        %s487 = scalar_lea.vmem %s4, %s486
      $region52: #{down_forward.4} parent=47 // pred_fallthru
        _
      // Predicated region
      $region53: #{down_forward.4} parent=47 // pred_check
        %p488 = pneg %p156
      $region54: #{down_forward.4} parent=47 // pred_check_branch
        %490 = sbr.rel (%p488) target = $region56
      $region55: #{down_forward.4} parent=47 // pred_region
        %p491 = scmp.lt.s32.totalorder %s18, 1
        %s492 = scalar_select %p491, %s18, 1
        %s493 = smul.addr %s492, 2
        %s494 = scalar_lea.vmem %s5, %s493
      $region56: #{down_forward.4} parent=47 // pred_fallthru
        _
    $region48: #{down_forward.4} parent=5 // pred_fallthru
      _
  $region6: #{down_forward.4} parent=0 // loop_footer
    %s16 = sadd.s32 1, %s12
  $region7: #{down_forward.4} parent=0 // loop_footer_branch
    %11 = sbr.rel target = $region3
  $region8: #{down_forward.4} parent=0 // loop_exit
    _

</llo_original>
